<compile_context>
chip_gen: v5e
topology: v5e:2x2
jax: 0.10.0
libtpu: 0.0.40
codegen_flags: <defaults>
</compile_context>

<pallas_src>
import jax
import jax.numpy as jnp
from jax.experimental import pallas as pl
from jax.experimental.pallas import tpu as pltpu


# --------------------------------------------------------------------------
# Pallas kernel: fused SqueezeExcite for one batch element
# --------------------------------------------------------------------------
def _se_kernel(x_ref, w1_ref, b1_ref, w2_ref, b2_ref, o_ref):
    """
    x_ref : (1, C, L)  f32   activation slab, NCL layout (lane axis = L)
    w1_ref: (Cr, C)    f32   Conv1d(C -> Cr, k=1) weight (kernel dim squeezed)
    b1_ref: (Cr, 1)    f32
    w2_ref: (C, Cr)    f32   Conv1d(Cr -> C, k=1) weight (kernel dim squeezed)
    b2_ref: (C, 1)     f32
    o_ref : (1, C, L)
    """
    x = x_ref[0].astype(jnp.float32)                       # (C, L)

    # x.mean(2, keepdim=True): global average pool along L (XLU lane reduce)
    pooled = jnp.mean(x, axis=-1, keepdims=True)           # (C, 1)

    # Conv1d(C -> Cr, k=1) + ReLU  ==  (Cr, C) @ (C, 1)
    h = jnp.dot(w1_ref[...], pooled,
                preferred_element_type=jnp.float32)        # (Cr, 1)
    h = jnp.maximum(h + b1_ref[...], 0.0)

    # Conv1d(Cr -> C, k=1) + Sigmoid  ==  (C, Cr) @ (Cr, 1)
    z = jnp.dot(w2_ref[...], h,
                preferred_element_type=jnp.float32)        # (C, 1)
    s = jax.nn.sigmoid(z + b2_ref[...])                    # EUP, f32

    # out = x * x_se : channel-wise rescale, broadcast along the lane (L) axis
    o_ref[0] = (x * s).astype(o_ref.dtype)


def squeeze_excite(x, params):
    """x: (N, C, L) float32, NCL layout as in the PyTorch module."""
    N, C, L = x.shape
    w1, b1, w2, b2 = params["w1"], params["b1"], params["w2"], params["b2"]
    Cr = w1.shape[0]
    return pl.pallas_call(
        _se_kernel,
        out_shape=jax.ShapeDtypeStruct((N, C, L), x.dtype),
        grid=(N,),
        in_specs=[
            pl.BlockSpec((1, C, L), lambda n: (n, 0, 0)),   # per-sample slab
            pl.BlockSpec((Cr, C), lambda n: (0, 0)),        # weights: constant
            pl.BlockSpec((Cr, 1), lambda n: (0, 0)),        #   index_map ->
            pl.BlockSpec((C, Cr), lambda n: (0, 0)),        #   stay resident
            pl.BlockSpec((C, 1), lambda n: (0, 0)),         #   in VMEM
        ],
        out_specs=pl.BlockSpec((1, C, L), lambda n: (n, 0, 0)),
        compiler_params=pltpu.CompilerParams(
            dimension_semantics=("parallel",),   # megacore sharding on v7x
            vmem_limit_bytes=32 * 1024 * 1024,
        ),
    )(x, w1, b1, w2, b2)


# --------------------------------------------------------------------------
# Parameters (Conv1d default init intent), shaped once for the kernel
# --------------------------------------------------------------------------
def init_se_params(key, channels, reduction_ratio=0.25):
    reduced = int(channels * reduction_ratio)
    k1, k2, k3, k4 = jax.random.split(key, 4)
    bound1 = 1.0 / (channels ** 0.5)     # fan_in = C * k = C   (k = 1)
    bound2 = 1.0 / (reduced ** 0.5)      # fan_in = Cr
    w1 = jax.random.uniform(k1, (reduced, channels), jnp.float32, -bound1, bound1)
    b1 = jax.random.uniform(k2, (reduced,), jnp.float32, -bound1, bound1)
    w2 = jax.random.uniform(k3, (channels, reduced), jnp.float32, -bound2, bound2)
    b2 = jax.random.uniform(k4, (channels,), jnp.float32, -bound2, bound2)
    # Keep everything f32: the bottleneck matmuls are a few hundred MACs, so
    # the kernel is HBM-bound and f32 costs nothing while matching PyTorch.
    return {
        "w1": w1,
        "b1": b1.reshape(reduced, 1),
        "w2": w2,
        "b2": b2.reshape(channels, 1),
    }


def se_reference(x, params):
    """Pure-JAX reference of the PyTorch forward."""
    w1, w2 = params["w1"], params["w2"]
    b1 = params["b1"][None]                               # (1, Cr, 1)
    b2 = params["b2"][None]                               # (1, C, 1)
    pooled = jnp.mean(x, axis=2, keepdims=True)           # (N, C, 1)
    h = jnp.maximum(jnp.einsum("rc,ncl->nrl", w1, pooled) + b1, 0.0)
    s = jax.nn.sigmoid(jnp.einsum("cr,nrl->ncl", w2, h) + b2)
    return x * s


# --------------------------------------------------------------------------
if __name__ == "__main__":
    key = jax.random.PRNGKey(0)
    k_param, k_x = jax.random.split(key)

    N, C, L = 2, 32, 256                 # reduction_ratio=0.25 -> Cr=8
    params = init_se_params(k_param, C, reduction_ratio=0.25)
    x = jax.random.normal(k_x, (N, C, L), jnp.float32)

    out = squeeze_excite(x, params)
    out = jax.block_until_ready(out)

    ref = se_reference(x, params)
    assert out.shape == (N, C, L)
    assert bool(jnp.all(jnp.isfinite(out)))
    assert bool(jnp.allclose(out, ref, rtol=2e-2, atol=2e-2))
    print("KERNEL_OK")
</pallas_src>

<mosaic_0001>
module attributes {stable_mosaic.version = 11 : i64} {
  func.func @_se_kernel(%arg0: i32, %arg1: memref<1x32x256xf32, #tpu.memory_space<vmem>>, %arg2: memref<8x32xf32, #tpu.memory_space<vmem>>, %arg3: memref<8x1xf32, #tpu.memory_space<vmem>>, %arg4: memref<32x8xf32, #tpu.memory_space<vmem>>, %arg5: memref<32x1xf32, #tpu.memory_space<vmem>>, %arg6: memref<1x32x256xf32, #tpu.memory_space<vmem>>) attributes {dimension_semantics = [#tpu.dimension_semantics<parallel>], iteration_bounds = array<i64: 2>, scalar_prefetch = 0 : i64, scratch_operands = 0 : i64, tpu.core_type = #tpu.core_type<tc>, window_params = [{transform_indices = @transform_0, window_bounds = array<i64: 1, 32, 256>}, {pipeline_mode = #tpu.pipeline_mode<synchronous>, transform_indices = @transform_1, window_bounds = array<i64: 8, 32>}, {pipeline_mode = #tpu.pipeline_mode<synchronous>, transform_indices = @transform_2, window_bounds = array<i64: 8, 1>}, {pipeline_mode = #tpu.pipeline_mode<synchronous>, transform_indices = @transform_3, window_bounds = array<i64: 32, 8>}, {pipeline_mode = #tpu.pipeline_mode<synchronous>, transform_indices = @transform_4, window_bounds = array<i64: 32, 1>}, {transform_indices = @transform_5, window_bounds = array<i64: 1, 32, 256>}]} {
    %c0 = arith.constant 0 : index
    %c0_0 = arith.constant 0 : index
    %c0_1 = arith.constant 0 : index
    %0 = vector.load %arg1[%c0, %c0_0, %c0_1] : memref<1x32x256xf32, #tpu.memory_space<vmem>>, vector<1x32x256xf32>
    %1 = vector.shape_cast %0 : vector<1x32x256xf32> to vector<32x256xf32>
    %cst = arith.constant dense<0.000000e+00> : vector<32xf32>
    %2 = vector.multi_reduction <add>, %1, %cst [1] : vector<32x256xf32> to vector<32xf32>
    %3 = vector.shape_cast %2 : vector<32xf32> to vector<32x1xf32>
    %cst_2 = arith.constant 2.560000e+02 : f32
    %4 = vector.broadcast %cst_2 : f32 to vector<32x1xf32>
    %5 = arith.divf %3, %4 : vector<32x1xf32>
    %c0_3 = arith.constant 0 : index
    %c0_4 = arith.constant 0 : index
    %6 = vector.load %arg2[%c0_3, %c0_4] : memref<8x32xf32, #tpu.memory_space<vmem>>, vector<8x32xf32>
    %cst_5 = arith.constant dense<0.000000e+00> : vector<8x1xf32>
    %7 = tpu.matmul %6, %5, %cst_5 {dimension_numbers = #tpu.dot_dimension_numbers<[1], [0], [0], [1], [0, 0, 1, 1], [], []>} : vector<8x32xf32>, vector<32x1xf32>, vector<8x1xf32> -> vector<8x1xf32>
    %c0_6 = arith.constant 0 : index
    %c0_7 = arith.constant 0 : index
    %8 = vector.load %arg3[%c0_6, %c0_7] : memref<8x1xf32, #tpu.memory_space<vmem>>, vector<8x1xf32>
    %9 = arith.addf %7, %8 : vector<8x1xf32>
    %cst_8 = arith.constant 0.000000e+00 : f32
    %10 = vector.broadcast %cst_8 : f32 to vector<8x1xf32>
    %11 = arith.maximumf %9, %10 : vector<8x1xf32>
    %c0_9 = arith.constant 0 : index
    %c0_10 = arith.constant 0 : index
    %12 = vector.load %arg4[%c0_9, %c0_10] : memref<32x8xf32, #tpu.memory_space<vmem>>, vector<32x8xf32>
    %cst_11 = arith.constant dense<0.000000e+00> : vector<32x1xf32>
    %13 = tpu.matmul %12, %11, %cst_11 {dimension_numbers = #tpu.dot_dimension_numbers<[1], [0], [0], [1], [0, 0, 1, 1], [], []>} : vector<32x8xf32>, vector<8x1xf32>, vector<32x1xf32> -> vector<32x1xf32>
    %c0_12 = arith.constant 0 : index
    %c0_13 = arith.constant 0 : index
    %14 = vector.load %arg5[%c0_12, %c0_13] : memref<32x1xf32, #tpu.memory_space<vmem>>, vector<32x1xf32>
    %15 = arith.addf %13, %14 : vector<32x1xf32>
    %16 = arith.negf %15 : vector<32x1xf32>
    %17 = math.exp %16 : vector<32x1xf32>
    %cst_14 = arith.constant 1.000000e+00 : f32
    %18 = vector.broadcast %cst_14 : f32 to vector<32x1xf32>
    %19 = arith.addf %18, %17 : vector<32x1xf32>
    %20 = arith.divf %18, %19 : vector<32x1xf32>
    %21 = vector.broadcast %20 : vector<32x1xf32> to vector<32x256xf32>
    %22 = arith.mulf %1, %21 : vector<32x256xf32>
    %c0_15 = arith.constant 0 : index
    %c0_16 = arith.constant 0 : index
    %c0_17 = arith.constant 0 : index
    %23 = vector.load %arg6[%c0_15, %c0_16, %c0_17] : memref<1x32x256xf32, #tpu.memory_space<vmem>>, vector<1x32x256xf32>
    %24 = vector.shape_cast %23 : vector<1x32x256xf32> to vector<32x256xf32>
    %25 = vector.shape_cast %22 : vector<32x256xf32> to vector<1x32x256xf32>
    tpu.vector_store %arg6[%c0_15, %c0_16, %c0_17], %25 {strides = array<i32>} : memref<1x32x256xf32, #tpu.memory_space<vmem>>, vector<1x32x256xf32>,
    return
  }
  func.func @transform_0(%arg0: i32) -> (i32, i32, i32) {
    %c0_i32 = arith.constant 0 : i32
    %c0_i32_0 = arith.constant 0 : i32
    %c0_i32_1 = arith.constant 0 : i32
    return %arg0, %c0_i32, %c0_i32_0 : i32, i32, i32
  }
  func.func @transform_1(%arg0: i32) -> (i32, i32) {
    %c0_i32 = arith.constant 0 : i32
    %c0_i32_0 = arith.constant 0 : i32
    %c0_i32_1 = arith.constant 0 : i32
    return %c0_i32, %c0_i32_0 : i32, i32
  }
  func.func @transform_2(%arg0: i32) -> (i32, i32) {
    %c0_i32 = arith.constant 0 : i32
    %c0_i32_0 = arith.constant 0 : i32
    %c0_i32_1 = arith.constant 0 : i32
    return %c0_i32, %c0_i32_0 : i32, i32
  }
  func.func @transform_3(%arg0: i32) -> (i32, i32) {
    %c0_i32 = arith.constant 0 : i32
    %c0_i32_0 = arith.constant 0 : i32
    %c0_i32_1 = arith.constant 0 : i32
    return %c0_i32, %c0_i32_0 : i32, i32
  }
  func.func @transform_4(%arg0: i32) -> (i32, i32) {
    %c0_i32 = arith.constant 0 : i32
    %c0_i32_0 = arith.constant 0 : i32
    %c0_i32_1 = arith.constant 0 : i32
    return %c0_i32, %c0_i32_0 : i32, i32
  }
  func.func @transform_5(%arg0: i32) -> (i32, i32, i32) {
    %c0_i32 = arith.constant 0 : i32
    %c0_i32_0 = arith.constant 0 : i32
    %c0_i32_1 = arith.constant 0 : i32
    return %arg0, %c0_i32, %c0_i32_0 : i32, i32, i32
  }
}

</mosaic_0001>

<llo_original>
// kernel: tpu_custom_call.1
$region0: #{tpu_custom_call.1}
  #allocation0 [shape = 'u32[]', space=smem, size = 0x4, offset = 0x4, fixed_abs, tag = 'smem constant byte address 0x4 - core index']
  #allocation1 [shape = 'u32[72,128]{1,0:T(1,128)}', space=vmem, size = 0x9000, scoped, tag = 'internal scratch']
  %s0 = inlined_call_operand.hbm [shape: f32[2,32,256], index: 0, kind: input, shape index: {}]
  %s1 = inlined_call_operand.vmem [shape: f32[8,32], index: 1, kind: input, shape index: {}]
  %s2 = inlined_call_operand.vmem [shape: f32[8,1], index: 2, kind: input, shape index: {}]
  %s3 = inlined_call_operand.vmem [shape: f32[32,8], index: 3, kind: input, shape index: {}]
  %s4 = inlined_call_operand.vmem [shape: f32[32,1], index: 4, kind: input, shape index: {}]
  %s5 = inlined_call_operand.hbm [shape: f32[2,32,256], index: 5, kind: output, shape index: {}]
  %s6 = sld [smem:[#allocation0]]
  $region57: #{tpu_custom_call.1} parent=0
    _
  %s8 = ssub.s32 1, %s6
  %s9 = scalar_select 0, %s8, %s6
  $region1: #{tpu_custom_call.1} parent=0
    #allocation2 [shape = 'u8[65536]{0}', space=vmem, size = 0x10000, scoped, tag = 'input window, operand 0']
    #allocation3 [shape = 's32[2]{0}', space=sflag, size = 0x8, scoped, tag = 'scoped memory for tpu_custom_call.1']
    #allocation4 [shape = 's32[2]{0}', space=sflag, size = 0x8, scoped, tag = 'scoped memory for tpu_custom_call.1']
    #allocation5 [shape = 'u8[65536]{0}', space=vmem, size = 0x10000, scoped, tag = 'output window, operand 0']
    %10 = vsyncpa [#allocation3], 0
    %s11 = scalar_lea.sflag [#allocation3], 1
    %12 = vsyncpa %s11, 0
    %13 = vsyncpa [#allocation4], 0
    %s14 = scalar_lea.sflag [#allocation4], 1
    %15 = vsyncpa %s14, 0
    loop: start=0, step=1, limit=4
    $region2: #{tpu_custom_call.1} parent=1 // loop_pre_header
      _
    $region3: #{tpu_custom_call.1} parent=1 // loop_header
      %s17 = sphi 0, %s21
      %p18 = scmp.ge.s32.totalorder %s17, 4
      %s27 = sphi 0, %s29
      %s30 = sphi 0, %s27
      %s31 = sphi 0, %s30
      %s47 = sphi 0, %s31
      %s51 = sphi 0, %s51
      %s53 = sphi 0, %s51
      %s54 = sphi 0, %s53
      %s68 = sphi 0, %s54
      %s72 = sphi 0, %s72
      %s74 = sphi 0, %s72
      %s75 = sphi 0, %s74
      %s89 = sphi 0, %s75
      %s93 = sphi 0, %s93
      %s95 = sphi 0, %s93
      %s96 = sphi 0, %s95
      %s110 = sphi 0, %s96
      %s114 = sphi 0, %s114
      %s116 = sphi 0, %s114
      %s117 = sphi 0, %s116
      %s131 = sphi 0, %s117
      %s137 = sphi 0, %s139
      %s140 = sphi 0, %s137
      %s141 = sphi 0, %s140
      %s157 = sphi 0, %s141
    $region4: #{tpu_custom_call.1} parent=1 // loop_header_branch
      %20 = sbr.rel (%p18) target = $region8
    $region5: #{tpu_custom_call.1} parent=1 // loop_body
      %s22 = ssub.s32 %s17, 1
      %s23 = ssub.s32 %s17, 2
      %s24 = sadd.s32 %s17, 1
      %s25 = ssub.s32 %s17, %s24
      %p26 = scmp.eq.s32.totalorder %s25, 0
      %s28 = sadd.s32 %s27, 1
      %s29 = scalar_select %p26, %s27, %s28
      %p32 = pneg %p26
      %p33 = scmp.eq.s32.totalorder %s17, 1
      %p34 = por %p32, %p33
      %p35 = scmp.ne.s32.totalorder %s27, %s30
      %p36 = scmp.eq.s32.totalorder %s17, 0
      %p37 = por %p35, %p36
      %p38 = scmp.ne.s32.totalorder %s27, %s30
      %p39 = scmp.eq.s32.totalorder %s22, 1
      %p40 = por %p38, %p39
      %p41 = scmp.ne.s32.totalorder %s30, %s31
      %p42 = scmp.eq.s32.totalorder %s22, 0
      %p43 = por %p41, %p42
      %p44 = scmp.ne.s32.totalorder %s30, %s31
      %p45 = scmp.eq.s32.totalorder %s23, 1
      %p46 = por %p44, %p45
      %p48 = scmp.ne.s32.totalorder %s31, %s47
      %p49 = scmp.eq.s32.totalorder %s23, 0
      %p50 = por %p48, %p49
      %s52 = sadd.s32 %s51, 1
      %p55 = scmp.eq.s32.totalorder %s17, 1
      %p56 = scmp.ne.s32.totalorder %s51, %s53
      %p57 = scmp.eq.s32.totalorder %s17, 0
      %p58 = por %p56, %p57
      %p59 = scmp.ne.s32.totalorder %s51, %s53
      %p60 = scmp.eq.s32.totalorder %s22, 1
      %p61 = por %p59, %p60
      %p62 = scmp.ne.s32.totalorder %s53, %s54
      %p63 = scmp.eq.s32.totalorder %s22, 0
      %p64 = por %p62, %p63
      %p65 = scmp.ne.s32.totalorder %s53, %s54
      %p66 = scmp.eq.s32.totalorder %s23, 1
      %p67 = por %p65, %p66
      %p69 = scmp.ne.s32.totalorder %s54, %s68
      %p70 = scmp.eq.s32.totalorder %s23, 0
      %p71 = por %p69, %p70
      %s73 = sadd.s32 %s72, 1
      %p76 = scmp.eq.s32.totalorder %s17, 1
      %p77 = scmp.ne.s32.totalorder %s72, %s74
      %p78 = scmp.eq.s32.totalorder %s17, 0
      %p79 = por %p77, %p78
      %p80 = scmp.ne.s32.totalorder %s72, %s74
      %p81 = scmp.eq.s32.totalorder %s22, 1
      %p82 = por %p80, %p81
      %p83 = scmp.ne.s32.totalorder %s74, %s75
      %p84 = scmp.eq.s32.totalorder %s22, 0
      %p85 = por %p83, %p84
      %p86 = scmp.ne.s32.totalorder %s74, %s75
      %p87 = scmp.eq.s32.totalorder %s23, 1
      %p88 = por %p86, %p87
      %p90 = scmp.ne.s32.totalorder %s75, %s89
      %p91 = scmp.eq.s32.totalorder %s23, 0
      %p92 = por %p90, %p91
      %s94 = sadd.s32 %s93, 1
      %p97 = scmp.eq.s32.totalorder %s17, 1
      %p98 = scmp.ne.s32.totalorder %s93, %s95
      %p99 = scmp.eq.s32.totalorder %s17, 0
      %p100 = por %p98, %p99
      %p101 = scmp.ne.s32.totalorder %s93, %s95
      %p102 = scmp.eq.s32.totalorder %s22, 1
      %p103 = por %p101, %p102
      %p104 = scmp.ne.s32.totalorder %s95, %s96
      %p105 = scmp.eq.s32.totalorder %s22, 0
      %p106 = por %p104, %p105
      %p107 = scmp.ne.s32.totalorder %s95, %s96
      %p108 = scmp.eq.s32.totalorder %s23, 1
      %p109 = por %p107, %p108
      %p111 = scmp.ne.s32.totalorder %s96, %s110
      %p112 = scmp.eq.s32.totalorder %s23, 0
      %p113 = por %p111, %p112
      %s115 = sadd.s32 %s114, 1
      %p118 = scmp.eq.s32.totalorder %s17, 1
      %p119 = scmp.ne.s32.totalorder %s114, %s116
      %p120 = scmp.eq.s32.totalorder %s17, 0
      %p121 = por %p119, %p120
      %p122 = scmp.ne.s32.totalorder %s114, %s116
      %p123 = scmp.eq.s32.totalorder %s22, 1
      %p124 = por %p122, %p123
      %p125 = scmp.ne.s32.totalorder %s116, %s117
      %p126 = scmp.eq.s32.totalorder %s22, 0
      %p127 = por %p125, %p126
      %p128 = scmp.ne.s32.totalorder %s116, %s117
      %p129 = scmp.eq.s32.totalorder %s23, 1
      %p130 = por %p128, %p129
      %p132 = scmp.ne.s32.totalorder %s117, %s131
      %p133 = scmp.eq.s32.totalorder %s23, 0
      %p134 = por %p132, %p133
      %s135 = ssub.s32 %s17, %s24
      %p136 = scmp.eq.s32.totalorder %s135, 0
      %s138 = sadd.s32 %s137, 1
      %s139 = scalar_select %p136, %s137, %s138
      %p142 = pneg %p136
      %p143 = scmp.eq.s32.totalorder %s17, 1
      %p144 = por %p142, %p143
      %p145 = scmp.ne.s32.totalorder %s137, %s140
      %p146 = scmp.eq.s32.totalorder %s17, 0
      %p147 = por %p145, %p146
      %p148 = scmp.ne.s32.totalorder %s137, %s140
      %p149 = scmp.eq.s32.totalorder %s22, 1
      %p150 = por %p148, %p149
      %p151 = scmp.ne.s32.totalorder %s140, %s141
      %p152 = scmp.eq.s32.totalorder %s22, 0
      %p153 = por %p151, %p152
      %p154 = scmp.ne.s32.totalorder %s140, %s141
      %p155 = scmp.eq.s32.totalorder %s23, 1
      %p156 = por %p154, %p155
      %p158 = scmp.ne.s32.totalorder %s141, %s157
      %p159 = scmp.eq.s32.totalorder %s23, 0
      %p160 = por %p158, %p159
      %p161 = scmp.le.s32.totalorder 1, %s17
      %p162 = scmp.lt.s32.totalorder %s17, 3
      %p163 = pnand %p161, %p162
      %p164 = pneg %p163
      // Predicated region
      $region9: #{tpu_custom_call.1} parent=5 // pred_check
        _
      $region10: #{tpu_custom_call.1} parent=5 // pred_check_branch
        %166 = sbr.rel (%p163) target = $region12
      $region11: #{tpu_custom_call.1} parent=5 // pred_region
        %s167 = ssub.s32 %s17, 1
        // Predicated region
        $region13: #{tpu_custom_call.1} parent=11 // pred_check
          %p168 = pneg %p64
        $region14: #{tpu_custom_call.1} parent=11 // pred_check_branch
          %170 = sbr.rel (%p168) target = $region16
        $region15: #{tpu_custom_call.1} parent=11 // pred_region
          _
        $region16: #{tpu_custom_call.1} parent=11 // pred_fallthru
          _
        // Predicated region
        $region17: #{tpu_custom_call.1} parent=11 // pred_check
          %p171 = pneg %p85
        $region18: #{tpu_custom_call.1} parent=11 // pred_check_branch
          %173 = sbr.rel (%p171) target = $region20
        $region19: #{tpu_custom_call.1} parent=11 // pred_region
          _
        $region20: #{tpu_custom_call.1} parent=11 // pred_fallthru
          _
        // Predicated region
        $region21: #{tpu_custom_call.1} parent=11 // pred_check
          %p174 = pneg %p106
        $region22: #{tpu_custom_call.1} parent=11 // pred_check_branch
          %176 = sbr.rel (%p174) target = $region24
        $region23: #{tpu_custom_call.1} parent=11 // pred_region
          _
        $region24: #{tpu_custom_call.1} parent=11 // pred_fallthru
          _
        // Predicated region
        $region25: #{tpu_custom_call.1} parent=11 // pred_check
          %p177 = pneg %p127
        $region26: #{tpu_custom_call.1} parent=11 // pred_check_branch
          %179 = sbr.rel (%p177) target = $region28
        $region27: #{tpu_custom_call.1} parent=11 // pred_region
          _
        $region28: #{tpu_custom_call.1} parent=11 // pred_fallthru
          _
      $region12: #{tpu_custom_call.1} parent=5 // pred_fallthru
        _
      %p180 = scmp.lt.s32.totalorder %s17, 2
      // Predicated region
      $region29: #{tpu_custom_call.1} parent=5 // pred_check
        %p181 = pneg %p180
      $region30: #{tpu_custom_call.1} parent=5 // pred_check_branch
        %183 = sbr.rel (%p181) target = $region32
      $region31: #{tpu_custom_call.1} parent=5 // pred_region
        // Predicated region
        $region33: #{tpu_custom_call.1} parent=31 // pred_check
          %p184 = pneg %p37
        $region34: #{tpu_custom_call.1} parent=31 // pred_check_branch
          %186 = sbr.rel (%p184) target = $region36
        $region35: #{tpu_custom_call.1} parent=31 // pred_region
          %s187 = sand.u32 %s27, 1
          %s188 = scalar_lea.sflag [#allocation3], %s187
          %s189 = sand.u32 %s27, 1
          %s190 = smul.addr %s189, 64
          %s191 = scalar_lea.vmem [#allocation2], %s190
          %193 = vsyncadd %s188, 0
          %s194 = smul.addr %s17, 8
          %s195 = smul.addr %s194, 8
          %s196 = scalar_lea.hbm %s0, %s195
          %s197 = sshll.u32 %s196, 4
          %s198 = int_to_ptr.hbm [resolvable:$true] %s197
          %s199 = sshll.u32 %s191, 4
          %s200 = int_to_ptr.vmem [resolvable:$true] %s199
          %205 = dma.hbm_to_vmem [thread:$0]  %s198, 1024, %s200, %s188, 256, 256, 16
        $region36: #{tpu_custom_call.1} parent=31 // pred_fallthru
          _
      $region32: #{tpu_custom_call.1} parent=5 // pred_fallthru
        _
      %p206 = scmp.le.s32.totalorder 1, %s17
      %p207 = scmp.lt.s32.totalorder %s17, 3
      %p208 = pnand %p206, %p207
      %p209 = pneg %p208
      // Predicated region
      $region37: #{tpu_custom_call.1} parent=5 // pred_check
        _
      $region38: #{tpu_custom_call.1} parent=5 // pred_check_branch
        %211 = sbr.rel (%p208) target = $region40
      $region39: #{tpu_custom_call.1} parent=5 // pred_region
        %s212 = ssub.s32 %s17, 1
        %s213 = sand.u32 %s30, 1
        %s214 = scalar_lea.sflag [#allocation3], %s213
        %s215 = sand.u32 %s30, 1
        %s216 = smul.addr %s215, 64
        %s217 = scalar_lea.vmem [#allocation2], %s216
        // Predicated region
        $region41: #{tpu_custom_call.1} parent=39 // pred_check
          %p218 = pneg %p43
        $region42: #{tpu_custom_call.1} parent=39 // pred_check_branch
          %220 = sbr.rel (%p218) target = $region44
        $region43: #{tpu_custom_call.1} parent=39 // pred_region
          %222 = dma.done %s214, 1024
        $region44: #{tpu_custom_call.1} parent=39 // pred_fallthru
          _
        %s223 = sand.u32 %s30, 1
        %s224 = scalar_lea.sflag [#allocation3], %s223
        %s225 = sand.u32 %s30, 1
        %s226 = smul.addr %s225, 64
        %s227 = scalar_lea.vmem [#allocation2], %s226
        %p228 = pneg %p43
        %p229 = pneg %p40
        %p230 = pneg %p64
        %p231 = pneg %p61
        %p232 = pneg %p85
        %p233 = pneg %p82
        %p234 = pneg %p106
        %p235 = pneg %p103
        %p236 = pneg %p127
        %p237 = pneg %p124
        %p238 = pneg %p153
        %p239 = pneg %p150
        %s240 = sand.u32 %s140, 1
        %s241 = scalar_lea.sflag [#allocation4], %s240
        %s242 = sand.u32 %s140, 1
        %s243 = smul.addr %s242, 64
        %s244 = scalar_lea.vmem [#allocation5], %s243
        %v245 = vld [vmem:[%s217] sm:$0xff]
        %v246 = vld [vmem:[%s217 + $0x8] sm:$0xff]
        %v247 = vld [vmem:[%s217 + $0x10] sm:$0xff]
        %v248 = vld [vmem:[%s217 + $0x18] sm:$0xff]
        %v249 = vld [vmem:[%s217 + $0x20] sm:$0xff]
        %v250 = vld [vmem:[%s217 + $0x28] sm:$0xff]
        %v251 = vld [vmem:[%s217 + $0x30] sm:$0xff]
        %v252 = vld [vmem:[%s217 + $0x38] sm:$0xff]
        %v253 = vadd.f32 %v245, %v246
        %254 = vadd.xlane.f32.xlu0 %v253
        %v255 = vpop.xlane.xlu0 %254
        %v256 = vadd.f32 %v247, %v248
        %257 = vadd.xlane.f32.xlu0 %v256
        %v258 = vpop.xlane.xlu0 %257
        %v259 = vadd.f32 %v249, %v250
        %260 = vadd.xlane.f32.xlu0 %v259
        %v261 = vpop.xlane.xlu0 %260
        %v262 = vadd.f32 %v251, %v252
        %263 = vadd.xlane.f32.xlu0 %v262
        %v264 = vpop.xlane.xlu0 %263
        %v265 = vrcp.pop 256.0
        %v266 = vmul.f32 256.0, %v265
        %v267 = vsub.f32 1.0, %v266
        %v268 = vmul.f32 %v265, %v267
        %v269 = vadd.f32 %v265, %v268
        %vm270 = vweird.f32 %v265
        %v271 = vsel %vm270, %v265, %v269
        %v272 = vmul.f32 %v255, %v271
        %v273 = vmul.f32 %v258, %v271
        %v274 = vmul.f32 %v261, %v271
        %v275 = vmul.f32 %v264, %v271
        %v276 = vld [vmem:[%s1] sm:$0xff]
        %v277 = vld [vmem:[%s2] sm:$0xff]
        %vm278 = vcmask 261120
        %v280 = vsel %vm278, %v276, 0
        %282 = vmatpush.msra.mxu0 0.0
        %283 = vmatpush.msra.mxu0 0.0
        %284 = vmatpush.msra.mxu0 0.0
        %285 = vmatpush.msra.mxu0 0.0
        %286 = vmatpush.msra.mxu0 0.0
        %287 = vmatpush.msra.mxu0 0.0
        %288 = vmatpush.msra.mxu0 0.0
        %289 = vmatpush.msra.mxu0 0.0
        %290 = vmatpush.msra.mxu0 0.0
        %291 = vmatpush.msra.mxu0 0.0
        %292 = vmatpush.msra.mxu0 0.0
        %293 = vmatpush.msra.mxu0 0.0
        %294 = vmatpush.msra.mxu0 %v275
        %295 = vmatpush.msra.mxu0 %v274
        %296 = vmatpush.msra.mxu0 %v273
        %297 = vmatpush.msra.mxu0 %v272
        %298 = vmatmul.f32.gmra.mxu0 %v280
        %v299 = vpop.f32.mrf.mxu0
        %v300 = vadd.f32 %v277, %v299
        %301 = vdwg.mxu0
        %v302 = vmax.f32 %v300, 0.0
        %v303 = vld [vmem:[%s3] sm:$0xff]
        %v304 = vld [vmem:[%s3 + $0x8] sm:$0xff]
        %v305 = vld [vmem:[%s3 + $0x10] sm:$0xff]
        %v306 = vld [vmem:[%s3 + $0x18] sm:$0xff]
        %v307 = vld [vmem:[%s4] sm:$0xff]
        %v308 = vld [vmem:[%s4 + $0x8] sm:$0xff]
        %v309 = vld [vmem:[%s4 + $0x10] sm:$0xff]
        %v310 = vld [vmem:[%s4 + $0x18] sm:$0xff]
        %vm311 = vcmask 64512
        %v313 = vsel %vm311, %v303, 0
        %v316 = vsel %vm311, %v304, 0
        %v319 = vsel %vm311, %v305, 0
        %v322 = vsel %vm311, %v306, 0
        %324 = vmatpush.msra.mxu0 0.0
        %325 = vmatpush.msra.mxu0 0.0
        %326 = vmatpush.msra.mxu0 0.0
        %327 = vmatpush.msra.mxu0 0.0
        %328 = vmatpush.msra.mxu0 0.0
        %329 = vmatpush.msra.mxu0 0.0
        %330 = vmatpush.msra.mxu0 0.0
        %331 = vmatpush.msra.mxu0 0.0
        %332 = vmatpush.msra.mxu0 0.0
        %333 = vmatpush.msra.mxu0 0.0
        %334 = vmatpush.msra.mxu0 0.0
        %335 = vmatpush.msra.mxu0 0.0
        %336 = vmatpush.msra.mxu0 0.0
        %337 = vmatpush.msra.mxu0 0.0
        %338 = vmatpush.msra.mxu0 0.0
        %339 = vmatpush.msra.mxu0 %v302
        %340 = vmatmul.f32.gmra.mxu0 %v313
        %v341 = vpop.f32.mrf.mxu0
        %v342 = vadd.f32 %v307, %v341
        %343 = vmatmul.f32.gmra.mxu0 %v316
        %v344 = vpop.f32.mrf.mxu0
        %v345 = vadd.f32 %v308, %v344
        %346 = vmatmul.f32.gmra.mxu0 %v319
        %v347 = vpop.f32.mrf.mxu0
        %v348 = vadd.f32 %v309, %v347
        %349 = vmatmul.f32.gmra.mxu0 %v322
        %v350 = vpop.f32.mrf.mxu0
        %v351 = vadd.f32 %v310, %v350
        %352 = vdwg.mxu0
        %v353 = vxor.u32 %v342, 2147483648
        %v354 = vxor.u32 %v345, 2147483648
        %v355 = vxor.u32 %v348, 2147483648
        %v356 = vxor.u32 %v351, 2147483648
        %v357 = vmul.f32 %v353, 1.442695
        %v358 = vpow.pop %v357
        %v359 = vmul.f32 %v354, 1.442695
        %v360 = vpow.pop %v359
        %v361 = vmul.f32 %v355, 1.442695
        %v362 = vpow.pop %v361
        %v363 = vmul.f32 %v356, 1.442695
        %v364 = vpow.pop %v363
        %v365 = vadd.f32 %v358, 1.0
        %v366 = vadd.f32 %v360, 1.0
        %v367 = vadd.f32 %v362, 1.0
        %v368 = vadd.f32 %v364, 1.0
        %v369 = vrcp.pop %v365
        %v370 = vmul.f32 %v365, %v369
        %v371 = vsub.f32 1.0, %v370
        %v372 = vmul.f32 %v369, %v371
        %v373 = vadd.f32 %v369, %v372
        %vm374 = vweird.f32 %v365
        %vm375 = vweird.f32 %v369
        %vm376 = vmor %vm374, %vm375
        %v377 = vsel %vm376, %v369, %v373
        %v378 = vand.u32 2147483647, %v365
        %vm379 = vcmp.eq.f32.partialorder %v378, 8.507059e+37
        %v380 = vand.u32 %v365, 2147483648
        %v381 = vor.u32 1.1754944e-38, %v380
        %v382 = vsel %vm379, %v381, %v377
        %v383 = vmul.f32 1.0, %v382
        %v384 = vrcp.pop %v366
        %v385 = vmul.f32 %v366, %v384
        %v386 = vsub.f32 1.0, %v385
        %v387 = vmul.f32 %v384, %v386
        %v388 = vadd.f32 %v384, %v387
        %vm389 = vweird.f32 %v366
        %vm390 = vweird.f32 %v384
        %vm391 = vmor %vm389, %vm390
        %v392 = vsel %vm391, %v384, %v388
        %v393 = vand.u32 2147483647, %v366
        %vm394 = vcmp.eq.f32.partialorder %v393, 8.507059e+37
        %v395 = vand.u32 %v366, 2147483648
        %v396 = vor.u32 1.1754944e-38, %v395
        %v397 = vsel %vm394, %v396, %v392
        %v398 = vmul.f32 1.0, %v397
        %v399 = vrcp.pop %v367
        %v400 = vmul.f32 %v367, %v399
        %v401 = vsub.f32 1.0, %v400
        %v402 = vmul.f32 %v399, %v401
        %v403 = vadd.f32 %v399, %v402
        %vm404 = vweird.f32 %v367
        %vm405 = vweird.f32 %v399
        %vm406 = vmor %vm404, %vm405
        %v407 = vsel %vm406, %v399, %v403
        %v408 = vand.u32 2147483647, %v367
        %vm409 = vcmp.eq.f32.partialorder %v408, 8.507059e+37
        %v410 = vand.u32 %v367, 2147483648
        %v411 = vor.u32 1.1754944e-38, %v410
        %v412 = vsel %vm409, %v411, %v407
        %v413 = vmul.f32 1.0, %v412
        %v414 = vrcp.pop %v368
        %v415 = vmul.f32 %v368, %v414
        %v416 = vsub.f32 1.0, %v415
        %v417 = vmul.f32 %v414, %v416
        %v418 = vadd.f32 %v414, %v417
        %vm419 = vweird.f32 %v368
        %vm420 = vweird.f32 %v414
        %vm421 = vmor %vm419, %vm420
        %v422 = vsel %vm421, %v414, %v418
        %v423 = vand.u32 2147483647, %v368
        %vm424 = vcmp.eq.f32.partialorder %v423, 8.507059e+37
        %v425 = vand.u32 %v368, 2147483648
        %v426 = vor.u32 1.1754944e-38, %v425
        %v427 = vsel %vm424, %v426, %v422
        %v428 = vmul.f32 1.0, %v427
        %430 = vset.pattern.permute.xlu0 0
        %431 = vperm.xlu0 %430, %v383
        %v432 = vpop.permute.xlu0 %431
        %435 = vset.pattern.permute.xlu0 0
        %436 = vperm.xlu0 %435, %v398
        %v437 = vpop.permute.xlu0 %436
        %440 = vset.pattern.permute.xlu0 0
        %441 = vperm.xlu0 %440, %v413
        %v442 = vpop.permute.xlu0 %441
        %445 = vset.pattern.permute.xlu0 0
        %446 = vperm.xlu0 %445, %v428
        %v447 = vpop.permute.xlu0 %446
        %v449 = vmul.f32 %v245, %v432
        %v450 = vmul.f32 %v246, %v432
        %v451 = vmul.f32 %v247, %v437
        %v452 = vmul.f32 %v248, %v437
        %v453 = vmul.f32 %v249, %v442
        %v454 = vmul.f32 %v250, %v442
        %v455 = vmul.f32 %v251, %v447
        %v456 = vmul.f32 %v252, %v447
        %457 = vst [vmem:[%s244] sm:$0xff] %v449
        %458 = vst [vmem:[%s244 + $0x8] sm:$0xff] %v450
        %459 = vst [vmem:[%s244 + $0x10] sm:$0xff] %v451
        %460 = vst [vmem:[%s244 + $0x18] sm:$0xff] %v452
        %461 = vst [vmem:[%s244 + $0x20] sm:$0xff] %v453
        %462 = vst [vmem:[%s244 + $0x28] sm:$0xff] %v454
        %463 = vst [vmem:[%s244 + $0x30] sm:$0xff] %v455
        %464 = vst [vmem:[%s244 + $0x38] sm:$0xff] %v456
        %s465 = sand.u32 %s140, 1
        %s466 = scalar_lea.sflag [#allocation4], %s465
        %s467 = sand.u32 %s140, 1
        %s468 = smul.addr %s467, 64
        %s469 = scalar_lea.vmem [#allocation5], %s468
        // Predicated region
        $region45: #{tpu_custom_call.1} parent=39 // pred_check
          %p470 = pneg %p150
        $region46: #{tpu_custom_call.1} parent=39 // pred_check_branch
          %472 = sbr.rel (%p470) target = $region48
        $region47: #{tpu_custom_call.1} parent=39 // pred_region
          %474 = vsyncadd %s466, 0
          %s475 = smul.addr %s22, 8
          %s476 = smul.addr %s475, 8
          %s477 = scalar_lea.hbm %s5, %s476
          %s478 = sshll.u32 %s469, 4
          %s479 = int_to_ptr.vmem [resolvable:$true] %s478
          %s480 = sshll.u32 %s477, 4
          %s481 = int_to_ptr.hbm [resolvable:$true] %s480
          %486 = dma.vmem_to_hbm [thread:$0]  %s479, 1024, %s481, %s466, 256, 256, 16
        $region48: #{tpu_custom_call.1} parent=39 // pred_fallthru
          _
      $region40: #{tpu_custom_call.1} parent=5 // pred_fallthru
        _
      %p487 = scmp.le.s32.totalorder 2, %s17
      // Predicated region
      $region49: #{tpu_custom_call.1} parent=5 // pred_check
        %p488 = pneg %p487
      $region50: #{tpu_custom_call.1} parent=5 // pred_check_branch
        %490 = sbr.rel (%p488) target = $region52
      $region51: #{tpu_custom_call.1} parent=5 // pred_region
        %s491 = ssub.s32 %s17, 2
        // Predicated region
        $region53: #{tpu_custom_call.1} parent=51 // pred_check
          %p492 = pneg %p156
        $region54: #{tpu_custom_call.1} parent=51 // pred_check_branch
          %494 = sbr.rel (%p492) target = $region56
        $region55: #{tpu_custom_call.1} parent=51 // pred_region
          %s495 = sand.u32 %s141, 1
          %s496 = scalar_lea.sflag [#allocation4], %s495
          %s497 = sand.u32 %s141, 1
          %s498 = smul.addr %s497, 64
          %s499 = scalar_lea.vmem [#allocation5], %s498
          %501 = dma.done %s496, 1024
        $region56: #{tpu_custom_call.1} parent=51 // pred_fallthru
          _
      $region52: #{tpu_custom_call.1} parent=5 // pred_fallthru
        _
    $region6: #{tpu_custom_call.1} parent=1 // loop_footer
      %s21 = sadd.s32 1, %s17
    $region7: #{tpu_custom_call.1} parent=1 // loop_footer_branch
      %16 = sbr.rel target = $region3
    $region8: #{tpu_custom_call.1} parent=1 // loop_exit
      _
    %502 = vsyncpa [#allocation3], 1
    %s503 = scalar_lea.sflag [#allocation3], 1
    %504 = vsyncpa %s503, 1
    %505 = vsyncpa [#allocation4], 1
    %s506 = scalar_lea.sflag [#allocation4], 1
    %507 = vsyncpa %s506, 1

</llo_original>
